<compile_context>
chip_gen: v5e
topology: v5e:2x2
jax: 0.10.0
libtpu: 0.0.40
codegen_flags: <defaults>
</compile_context>

<pallas_src>
import jax
import jax.numpy as jnp
from jax.experimental import pallas as pl
from jax.experimental.pallas import tpu as pltpu


def _round_up(x, m):
    return ((x + m - 1) // m) * m


def _vmem_capacity_bytes():
    try:
        return int(pltpu.get_tpu_info().vmem_capacity_bytes)
    except Exception:
        return 64 << 20  # conservative fallback (v7x per-TC VMEM)


def _device_tile_cap(itemsize):
    # bf16 tiles are half the bytes -> allow 2x more rows.
    cap = 4096 if itemsize <= 2 else 2048
    try:
        kind = jax.devices()[0].device_kind.lower()
    except Exception:
        kind = ""
    if "v5" in kind:
        cap = min(cap, 1024)   # ~0.8 TB/s HBM: per-step DMA already dwarfs fixed overhead
    elif "v6" in kind:
        cap = min(cap, 2048)
    return cap


def _pick_tm(M, H, itemsize, vmem_cap, cap):
    """Largest row tile (multiple of 128) fitting ~45% of VMEM double-buffered,
    preferring >= 2 grid steps so both v7x TensorCores get work."""
    if M < 1024:
        return M  # single full-extent block: always a legal BlockSpec, no padding needed
    Hl = _round_up(H, 128)
    budget = int(0.45 * vmem_cap)
    for cand in (4096, 2048, 1024, 512, 256, 128):
        if cand > cap or cand > M:
            continue
        est = 2 * cand * Hl * itemsize + 4 * 8 * cand * 4 + (1 << 20)
        if est > budget:
            continue
        if pl.cdiv(M, cand) >= 2:
            return cand
    return 128


def _arg_extraction_kernel(h_ref, w_ref, b_ref, mask_ref, out_ref):
    # h_ref:    (tM, H)   hidden-state rows (f32 or bf16)
    # w_ref:    (2, H)    fc weight, PyTorch (out, in) layout, same dtype as h
    # b_ref:    (2, 1)    fc bias (f32), broadcast along lanes
    # mask_ref: (1, tM)   token_type_ids (int32), broadcast over the 2 logit rows
    # out_ref:  (2, tM)   transposed logits -> lane-dense unmasked stores
    #
    # Contract over H: (2, H) x (tM, H) -> (2, tM). Same dimension_numbers as
    # flash-attention's q @ k^T (contract last dims of both) -> no big-tile transpose.
    logits_t = jax.lax.dot_general(
        w_ref[...], h_ref[...],
        dimension_numbers=(((1,), (1,)), ((), ())),
        preferred_element_type=jnp.float32,
    )
    logits_t = jax.nn.sigmoid(logits_t + b_ref[...])
    mask = mask_ref[...].astype(jnp.float32)          # (1, tM), broadcasts over rows
    out_ref[...] = (logits_t * mask).astype(out_ref.dtype)


def argument_extraction_head(hidden_state, fc_weight, fc_bias, token_type_ids):
    """Pallas implementation of: sigmoid(hidden @ W^T + b) * token_type_ids[..., None]."""
    B, S, H = hidden_state.shape
    M = B * S

    h2 = hidden_state.reshape(M, H)
    w = fc_weight.astype(h2.dtype)                 # native bf16 x bf16 -> f32 when encoder is bf16
    b = fc_bias.reshape(2, 1).astype(jnp.float32)
    mask = token_type_ids.reshape(1, M).astype(jnp.int32)

    itemsize = jnp.dtype(h2.dtype).itemsize
    vmem_cap = _vmem_capacity_bytes()
    tm = _pick_tm(M, H, itemsize, vmem_cap, _device_tile_cap(itemsize))
    grid = (pl.cdiv(M, tm),)                       # ragged last block clipped by Pallas: no jnp.pad

    # Layout-aware VMEM estimate: lane dim padded to 128, tiny arrays padded to 8 sublanes.
    Hl = _round_up(H, 128)
    h_tile = tm * Hl * itemsize
    small_tiles = 8 * tm * 4 + 8 * tm * 4          # (2, tm) out + (1, tm) mask, sublane-padded
    params = 2 * (16 * Hl * itemsize + 8 * 128 * 4)
    vmem_bytes = 2 * (h_tile + small_tiles) + params + (2 << 20)
    vmem_bytes = int(min(max(vmem_bytes, 4 << 20), int(0.85 * vmem_cap)))

    out_t = pl.pallas_call(
        _arg_extraction_kernel,
        out_shape=jax.ShapeDtypeStruct((2, M), jnp.float32),
        grid_spec=pltpu.PrefetchScalarGridSpec(
            num_scalar_prefetch=0,
            grid=grid,
            in_specs=[
                pl.BlockSpec((tm, H), lambda i: (i, 0)),   # hidden rows (streamed)
                pl.BlockSpec((2, H), lambda i: (0, 0)),    # fc weight (resident)
                pl.BlockSpec((2, 1), lambda i: (0, 0)),    # fc bias (resident)
                pl.BlockSpec((1, tm), lambda i: (0, i)),   # token_type mask
            ],
            out_specs=pl.BlockSpec((2, tm), lambda i: (0, i)),
        ),
        compiler_params=pltpu.CompilerParams(
            dimension_semantics=("parallel",),
            vmem_limit_bytes=vmem_bytes,
        ),
    )(h2, w, b, mask)

    # (2, M) -> (M, 2) -> (B, S, 2): cheap XLA layout plumbing outside the kernel.
    return out_t.T.reshape(B, S, 2)


def synthetic_encoder(input_ids, token_type_ids, attn_masks,
                      word_emb, type_emb, pos_emb):
    # TODO(synk): the real encoder is an external transformer (e.g. BERT) injected at
    # construction time; this deterministic embedding + tanh stand-in only supplies a
    # hidden_state of the correct shape/dtype.
    B, S = input_ids.shape
    h = word_emb[input_ids] + type_emb[token_type_ids] + pos_emb[None, :S, :]
    h = jnp.tanh(h) * attn_masks.astype(jnp.float32)[..., None]
    return h


def _reference(hidden_state, fc_weight, fc_bias, token_type_ids):
    h = hidden_state.astype(jnp.float32)
    ref = jax.nn.sigmoid(h @ fc_weight.T + fc_bias)
    return ref * token_type_ids.astype(jnp.float32)[..., None]


if __name__ == "__main__":
    # --- primary small-shape check (f32, single full-extent block) ---
    B, S, H = 2, 8, 32
    VOCAB = 50

    key = jax.random.PRNGKey(0)
    (k_ids, k_word, k_type, k_pos, k_w, k_b,
     k_h2, k_w2, k_b2, k_t2) = jax.random.split(key, 10)

    input_ids = jax.random.randint(k_ids, (B, S), 0, VOCAB, dtype=jnp.int32)
    token_type_ids = jnp.concatenate(
        [jnp.zeros((B, S // 2), jnp.int32), jnp.ones((B, S // 2), jnp.int32)], axis=1)
    attn_masks = jnp.ones((B, S), jnp.int32)

    word_emb = jax.random.normal(k_word, (VOCAB, H), jnp.float32) * 0.02
    type_emb = jax.random.normal(k_type, (2, H), jnp.float32) * 0.02
    pos_emb = jax.random.normal(k_pos, (S, H), jnp.float32) * 0.02
    fc_weight = jax.random.normal(k_w, (2, H), jnp.float32) * 0.1   # (out, in) like nn.Linear
    fc_bias = jax.random.normal(k_b, (2,), jnp.float32) * 0.1

    hidden_state = synthetic_encoder(input_ids, token_type_ids, attn_masks,
                                     word_emb, type_emb, pos_emb)

    logits = argument_extraction_head(hidden_state, fc_weight, fc_bias, token_type_ids)
    logits = jax.block_until_ready(logits)

    ref = _reference(hidden_state, fc_weight, fc_bias, token_type_ids)
    assert logits.shape == (B, S, 2)
    assert jnp.allclose(logits, ref, atol=1e-5), "mismatch vs reference (f32)"

    # --- secondary check: bf16 hidden state + ragged last block (M % tm != 0) ---
    B2, S2, H2 = 2, 768, 64                          # M = 1536 -> tm = 1024, grid = 2 (partial tail)
    hidden2 = (jax.random.normal(k_h2, (B2, S2, H2), jnp.float32) * 0.5).astype(jnp.bfloat16)
    fc_w2 = jax.random.normal(k_w2, (2, H2), jnp.float32) * 0.1
    fc_b2 = jax.random.normal(k_b2, (2,), jnp.float32) * 0.1
    tt2 = jax.random.randint(k_t2, (B2, S2), 0, 2, dtype=jnp.int32)

    logits2 = argument_extraction_head(hidden2, fc_w2, fc_b2, tt2)
    logits2 = jax.block_until_ready(logits2)
    ref2 = _reference(hidden2, fc_w2, fc_b2, tt2)
    assert logits2.shape == (B2, S2, 2)
    assert jnp.allclose(logits2, ref2, atol=2e-2), "mismatch vs reference (bf16/ragged)"

    print("KERNEL_OK")
</pallas_src>

<mosaic_0001>
module attributes {stable_mosaic.version = 11 : i64} {
  func.func @_arg_extraction_kernel(%arg0: i32, %arg1: memref<16x32xf32, #tpu.memory_space<vmem>>, %arg2: memref<2x32xf32, #tpu.memory_space<vmem>>, %arg3: memref<2x1xf32, #tpu.memory_space<vmem>>, %arg4: memref<1x16xi32, #tpu.memory_space<vmem>>, %arg5: memref<2x16xf32, #tpu.memory_space<vmem>>) attributes {dimension_semantics = [#tpu.dimension_semantics<parallel>], iteration_bounds = array<i64: 1>, scalar_prefetch = 0 : i64, scratch_operands = 0 : i64, tpu.core_type = #tpu.core_type<tc>, window_params = [{transform_indices = @transform_0, window_bounds = array<i64: 16, 32>}, {pipeline_mode = #tpu.pipeline_mode<synchronous>, transform_indices = @transform_1, window_bounds = array<i64: 2, 32>}, {pipeline_mode = #tpu.pipeline_mode<synchronous>, transform_indices = @transform_2, window_bounds = array<i64: 2, 1>}, {transform_indices = @transform_3, window_bounds = array<i64: 1, 16>}, {transform_indices = @transform_4, window_bounds = array<i64: 2, 16>}]} {
    %c0 = arith.constant 0 : index
    %c0_0 = arith.constant 0 : index
    %0 = vector.load %arg2[%c0, %c0_0] : memref<2x32xf32, #tpu.memory_space<vmem>>, vector<2x32xf32>
    %c0_1 = arith.constant 0 : index
    %c0_2 = arith.constant 0 : index
    %1 = vector.load %arg1[%c0_1, %c0_2] : memref<16x32xf32, #tpu.memory_space<vmem>>, vector<16x32xf32>
    %cst = arith.constant dense<0.000000e+00> : vector<2x16xf32>
    %2 = tpu.matmul %0, %1, %cst {dimension_numbers = #tpu.dot_dimension_numbers<[1], [1], [0], [0], [0, 0, 1, 0], [], []>} : vector<2x32xf32>, vector<16x32xf32>, vector<2x16xf32> -> vector<2x16xf32>
    %c0_3 = arith.constant 0 : index
    %c0_4 = arith.constant 0 : index
    %3 = vector.load %arg3[%c0_3, %c0_4] : memref<2x1xf32, #tpu.memory_space<vmem>>, vector<2x1xf32>
    %4 = vector.broadcast %3 : vector<2x1xf32> to vector<2x16xf32>
    %5 = arith.addf %2, %4 : vector<2x16xf32>
    %6 = arith.negf %5 : vector<2x16xf32>
    %7 = math.exp %6 : vector<2x16xf32>
    %cst_5 = arith.constant 1.000000e+00 : f32
    %8 = vector.broadcast %cst_5 : f32 to vector<2x16xf32>
    %9 = arith.addf %8, %7 : vector<2x16xf32>
    %10 = arith.divf %8, %9 : vector<2x16xf32>
    %c0_6 = arith.constant 0 : index
    %c0_7 = arith.constant 0 : index
    %11 = vector.load %arg4[%c0_6, %c0_7] : memref<1x16xi32, #tpu.memory_space<vmem>>, vector<1x16xi32>
    %12 = arith.sitofp %11 : vector<1x16xi32> to vector<1x16xf32>
    %13 = vector.broadcast %12 : vector<1x16xf32> to vector<2x16xf32>
    %14 = arith.mulf %10, %13 : vector<2x16xf32>
    %c0_8 = arith.constant 0 : index
    %c0_9 = arith.constant 0 : index
    %15 = vector.load %arg5[%c0_8, %c0_9] : memref<2x16xf32, #tpu.memory_space<vmem>>, vector<2x16xf32>
    tpu.vector_store %arg5[%c0_8, %c0_9], %14 {strides = array<i32>} : memref<2x16xf32, #tpu.memory_space<vmem>>, vector<2x16xf32>,
    return
  }
  func.func @transform_0(%arg0: i32) -> (i32, i32) {
    %c0_i32 = arith.constant 0 : i32
    %c0_i32_0 = arith.constant 0 : i32
    return %arg0, %c0_i32 : i32, i32
  }
  func.func @transform_1(%arg0: i32) -> (i32, i32) {
    %c0_i32 = arith.constant 0 : i32
    %c0_i32_0 = arith.constant 0 : i32
    %c0_i32_1 = arith.constant 0 : i32
    return %c0_i32, %c0_i32_0 : i32, i32
  }
  func.func @transform_2(%arg0: i32) -> (i32, i32) {
    %c0_i32 = arith.constant 0 : i32
    %c0_i32_0 = arith.constant 0 : i32
    %c0_i32_1 = arith.constant 0 : i32
    return %c0_i32, %c0_i32_0 : i32, i32
  }
  func.func @transform_3(%arg0: i32) -> (i32, i32) {
    %c0_i32 = arith.constant 0 : i32
    %c0_i32_0 = arith.constant 0 : i32
    return %c0_i32, %arg0 : i32, i32
  }
  func.func @transform_4(%arg0: i32) -> (i32, i32) {
    %c0_i32 = arith.constant 0 : i32
    %c0_i32_0 = arith.constant 0 : i32
    return %c0_i32, %arg0 : i32, i32
  }
}

</mosaic_0001>

<llo_original>
// kernel: tpu_custom_call.1
$region0: #{tpu_custom_call.1}
  #allocation0 [shape = 'u32[]', space=smem, size = 0x4, offset = 0x4, fixed_abs, tag = 'smem constant byte address 0x4 - core index']
  #allocation1 [shape = 'u32[72,128]{1,0:T(1,128)}', space=vmem, size = 0x9000, scoped, tag = 'internal scratch']
  %s0 = inlined_call_operand.hbm [shape: f32[16,32], index: 0, kind: input, shape index: {}]
  %s1 = inlined_call_operand.vmem [shape: f32[2,32], index: 1, kind: input, shape index: {}]
  %s2 = inlined_call_operand.vmem [shape: f32[2,1], index: 2, kind: input, shape index: {}]
  %s3 = inlined_call_operand.vmem [shape: s32[1,16], index: 3, kind: input, shape index: {}]
  %s4 = inlined_call_operand.hbm [shape: f32[2,16], index: 4, kind: output, shape index: {}]
  %s5 = sld [smem:[#allocation0]]
  $region30: #{tpu_custom_call.1} parent=0
    _
  %s7 = ssub.s32 1, %s5
  %s8 = scalar_select 0, %s7, %s5
  $region1: #{tpu_custom_call.1} parent=0
    #allocation2 [shape = 'u8[8192]{0}', space=vmem, size = 0x2000, scoped, tag = 'input window, operand 0, single buffered']
    #allocation3 [shape = 's32[1]{0}', space=sflag, size = 0x4, scoped, tag = 'scoped memory for tpu_custom_call.1']
    #allocation4 [shape = 's32[1]{0}', space=sflag, size = 0x4, scoped, tag = 'scoped memory for tpu_custom_call.1']
    #allocation5 [shape = 'u8[1024]{0}', space=vmem, size = 0x400, scoped, tag = 'output window, operand 0, single buffered']
    %9 = vsyncpa [#allocation3], 0
    %10 = vsyncpa [#allocation4], 0
    // Predicated region
    $region2: #{tpu_custom_call.1} parent=1 // pred_check
      _
    $region3: #{tpu_custom_call.1} parent=1 // pred_check_branch
      %12 = sbr.rel (0) target = $region5
    $region4: #{tpu_custom_call.1} parent=1 // pred_region
      %14 = vsyncadd [#allocation3], 0
      %s15 = sshll.u32 %s0, 4
      %s16 = int_to_ptr.hbm [resolvable:$true] %s15
      %s17 = sshll.u32 [#allocation2], 4
      %s18 = int_to_ptr.vmem [resolvable:$true] %s17
      %23 = dma.hbm_to_vmem [thread:$0]  %s16, 256, %s18, [#allocation3], 128, 128, 8
    $region5: #{tpu_custom_call.1} parent=1 // pred_fallthru
      _
    // Predicated region
    $region6: #{tpu_custom_call.1} parent=1 // pred_check
      _
    $region7: #{tpu_custom_call.1} parent=1 // pred_check_branch
      %25 = sbr.rel (0) target = $region9
    $region8: #{tpu_custom_call.1} parent=1 // pred_region
      _
    $region9: #{tpu_custom_call.1} parent=1 // pred_fallthru
      _
    // Predicated region
    $region10: #{tpu_custom_call.1} parent=1 // pred_check
      _
    $region11: #{tpu_custom_call.1} parent=1 // pred_check_branch
      %27 = sbr.rel (0) target = $region13
    $region12: #{tpu_custom_call.1} parent=1 // pred_region
      _
    $region13: #{tpu_custom_call.1} parent=1 // pred_fallthru
      _
    // Predicated region
    $region14: #{tpu_custom_call.1} parent=1 // pred_check
      _
    $region15: #{tpu_custom_call.1} parent=1 // pred_check_branch
      %29 = sbr.rel (0) target = $region17
    $region16: #{tpu_custom_call.1} parent=1 // pred_region
      _
    $region17: #{tpu_custom_call.1} parent=1 // pred_fallthru
      _
    // Predicated region
    $region18: #{tpu_custom_call.1} parent=1 // pred_check
      _
    $region19: #{tpu_custom_call.1} parent=1 // pred_check_branch
      %31 = sbr.rel (0) target = $region21
    $region20: #{tpu_custom_call.1} parent=1 // pred_region
      %33 = dma.done [#allocation3], 256
    $region21: #{tpu_custom_call.1} parent=1 // pred_fallthru
      _
    %v34 = vld [vmem:[%s1] sm:$0x3]
    %v35 = vld [vmem:[#allocation2] sm:$0xff]
    %v36 = vld [vmem:[#allocation2 + $0x8] sm:$0xff]
    %v37 = vld [vmem:[%s2] sm:$0x3]
    %39 = vset.pattern.permute.xlu0 0
    %40 = vperm.xlu0 %39, %v37
    %v41 = vpop.permute.xlu0 %40
    %vm43 = vcmask 261120
    %v45 = vsel %vm43, %v34, 0
    %v48 = vsel %vm43, %v35, 0
    %v51 = vsel %vm43, %v36, 0
    %53 = vmatpush.xpose.msra.mxu0 0.0
    %54 = vmatpush.xpose.msra.mxu0 0.0
    %55 = vmatpush.xpose.msra.mxu0 0.0
    %56 = vmatpush.xpose.msra.mxu0 0.0
    %57 = vmatpush.xpose.msra.mxu0 0.0
    %58 = vmatpush.xpose.msra.mxu0 0.0
    %59 = vmatpush.xpose.msra.mxu0 0.0
    %60 = vmatpush.xpose.msra.mxu0 0.0
    %61 = vmatpush.xpose.msra.mxu0 0.0
    %62 = vmatpush.xpose.msra.mxu0 0.0
    %63 = vmatpush.xpose.msra.mxu0 0.0
    %64 = vmatpush.xpose.msra.mxu0 0.0
    %65 = vmatpush.xpose.msra.mxu0 0.0
    %66 = vmatpush.xpose.msra.mxu0 0.0
    %67 = vmatpush.xpose.msra.mxu0 %v51
    %68 = vmatpush.xpose.msra.mxu0 %v48
    %69 = vmatmul.f32.gmra.mxu0 %v45
    %v70 = vpop.f32.mrf.mxu0
    %v71 = vadd.f32 %v41, %v70
    %72 = vdwg.mxu0
    %v73 = vxor.u32 %v71, 2147483648
    %v74 = vmul.f32 %v73, 1.442695
    %v75 = vpow.pop %v74
    %v76 = vadd.f32 %v75, 1.0
    %v77 = vrcp.pop %v76
    %v78 = vmul.f32 %v76, %v77
    %v79 = vsub.f32 1.0, %v78
    %v80 = vmul.f32 %v77, %v79
    %v81 = vadd.f32 %v77, %v80
    %vm82 = vweird.f32 %v76
    %vm83 = vweird.f32 %v77
    %vm84 = vmor %vm82, %vm83
    %v85 = vsel %vm84, %v77, %v81
    %v86 = vand.u32 2147483647, %v76
    %vm87 = vcmp.eq.f32.partialorder %v86, 8.507059e+37
    %v88 = vand.u32 %v76, 2147483648
    %v89 = vor.u32 1.1754944e-38, %v88
    %v90 = vsel %vm87, %v89, %v85
    %v91 = vmul.f32 1.0, %v90
    %v92 = vld [vmem:[%s3] sm:$0x1]
    %v93 = vcvt.s32.f32 %v92
    %v95 = vperm.slane %v93, 0
    %v97 = vmul.f32 %v91, %v95
    %vm98 = vcmask 123904
    %99 = vst.msk [vmem:[#allocation5] sm:$0x3] %vm98, %v97
    // Predicated region
    $region22: #{tpu_custom_call.1} parent=1 // pred_check
      _
    $region23: #{tpu_custom_call.1} parent=1 // pred_check_branch
      %101 = sbr.rel (0) target = $region25
    $region24: #{tpu_custom_call.1} parent=1 // pred_region
      %103 = vsyncadd [#allocation4], 0
      %s105 = sshll.u32 [#allocation5], 4
      %s106 = int_to_ptr.vmem [resolvable:$true] %s105
      %s107 = sshll.u32 %s4, 4
      %s108 = int_to_ptr.hbm [resolvable:$true] %s107
      %110 = dma.vmem_to_hbm [thread:$0]  %s106, 32, %s108, [#allocation4]
    $region25: #{tpu_custom_call.1} parent=1 // pred_fallthru
      _
    // Predicated region
    $region26: #{tpu_custom_call.1} parent=1 // pred_check
      _
    $region27: #{tpu_custom_call.1} parent=1 // pred_check_branch
      %112 = sbr.rel (0) target = $region29
    $region28: #{tpu_custom_call.1} parent=1 // pred_region
      %114 = dma.done [#allocation4], 32
    $region29: #{tpu_custom_call.1} parent=1 // pred_fallthru
      _
    %115 = vsyncpa [#allocation3], 1
    %116 = vsyncpa [#allocation4], 1

</llo_original>
